<compile_context>
chip_gen: v5e
topology: v5e:2x2
jax: 0.10.0
libtpu: 0.0.40
codegen_flags: <defaults>
</compile_context>

<pallas_src>
import jax
import jax.numpy as jnp
from jax.experimental import pallas as pl
from jax.experimental.pallas import tpu as pltpu

BN_EPS = 1e-5


def _bn_train_onepass(x):
    """BatchNorm1d, training mode, gamma=1 / beta=0, biased batch variance.

    One-pass statistics (E[x^2] - mean^2): both XLU reductions issue
    back-to-back, avoiding the extra VPU pass of the (x - mean)^2 form.
    """
    inv_n = 1.0 / x.shape[0]
    s = jnp.sum(x, axis=0, keepdims=True)
    ss = jnp.sum(x * x, axis=0, keepdims=True)
    mean = s * inv_n
    var = ss * inv_n - mean * mean
    return (x - mean) * jax.lax.rsqrt(var + BN_EPS)


def critic_kernel(obs_ref, act_ref,
                  w1_ref,
                  w2a_ref, w2b_ref,
                  w4_ref, b4_ref,
                  out_ref):
    obs = obs_ref[...]
    act = act_ref[...]

    # fc1 -> bn1 -> relu.  fc1 bias omitted: a per-column constant added right
    # before training-mode BN is cancelled by the mean subtraction.
    h1 = jnp.dot(obs, w1_ref[...], preferred_element_type=jnp.float32)
    h1 = jnp.maximum(_bn_train_onepass(h1), 0.0)

    # concat([h1, act], 1) @ W2  ==  h1 @ W2a + act @ W2b.  The act part has
    # K = action_size (tiny), so it is done as rank-1 VPU FMA updates instead
    # of a second MXU pass (avoids a wasted weight load + serialized MRF pop
    # on v5e/v6e).  fc2 bias cancelled by bn2 as above.
    h2 = jnp.dot(h1, w2a_ref[...], preferred_element_type=jnp.float32)
    w2b = w2b_ref[...]
    for i in range(w2b.shape[0]):              # static Python unroll, A iters
        h2 = h2 + act[:, i:i + 1] * w2b[i:i + 1, :]
    h2 = jnp.maximum(_bn_train_onepass(h2), 0.0)

    # fc4 (N=1 output): VPU multiply + XLU lane reduce instead of an MXU pass.
    # Stored lane-dense as (1, B) (batch along the lane axis).
    q = jnp.sum(h2 * w4_ref[...], axis=-1)     # (B,)
    out_ref[...] = q[None, :] + b4_ref[0]


@jax.jit
def critic_forward(obs, act, w1, w2a, w2b, w4_row, b4):
    B = obs.shape[0]
    vmem = pl.BlockSpec(memory_space=pltpu.MemorySpace.VMEM)
    smem = pl.BlockSpec(memory_space=pltpu.MemorySpace.SMEM)
    # Grid-less call: operand footprint ~150 KiB, far under default scoped
    # VMEM on v5e/v6e/v7x; with one iteration any pipelining is pure overhead.
    out_row = pl.pallas_call(
        critic_kernel,
        out_shape=jax.ShapeDtypeStruct((1, B), jnp.float32),
        in_specs=[vmem, vmem, vmem, vmem, vmem, vmem, smem],
        out_specs=vmem,
    )(obs, act, w1, w2a, w2b, w4_row, b4)
    return out_row.reshape(B, 1)               # cheap metadata reshape outside


def init_params(key, state_size, action_size, fc1_units=256, fc2_units=128):
    """Deterministic synthetic init mirroring the module's reset_parameters()."""
    k = jax.random.split(key, 8)
    # hidden_init uses weight.size()[0] == out_features in PyTorch
    lim1 = 1.0 / jnp.sqrt(jnp.float32(fc1_units))
    lim2 = 1.0 / jnp.sqrt(jnp.float32(fc2_units))

    w1 = jax.random.uniform(k[0], (state_size, fc1_units), jnp.float32, -lim1, lim1)
    b1 = jax.random.uniform(k[1], (1, fc1_units), jnp.float32, -lim1, lim1)

    w2 = jax.random.uniform(k[2], (fc1_units + action_size, fc2_units),
                            jnp.float32, -lim2, lim2)
    w2a = w2[:fc1_units, :]          # multiplies h1
    w2b = w2[fc1_units:, :]          # multiplies act
    b2 = jax.random.uniform(k[3], (1, fc2_units), jnp.float32, -lim2, lim2)

    # fc4 weight passed as a (1, fc2_units) row for the lane-reduce formulation
    w4_row = jax.random.uniform(k[4], (1, fc2_units), jnp.float32, -0.001, 0.001)
    b4 = jax.random.uniform(k[5], (1,), jnp.float32, -0.001, 0.001)
    return w1, b1, w2a, w2b, b2, w4_row, b4


def reference_forward(obs, act, w1, b1, w2a, w2b, b2, w4_row, b4):
    """Pure-JAX reference that keeps b1/b2 and two-pass BN exactly like the
    PyTorch module; the kernel drops the biases (BN cancels per-column
    constants) and uses one-pass statistics."""
    def bn(x):
        mean = jnp.mean(x, axis=0, keepdims=True)
        var = jnp.mean((x - mean) * (x - mean), axis=0, keepdims=True)
        return (x - mean) * jax.lax.rsqrt(var + BN_EPS)

    h1 = jnp.maximum(bn(obs @ w1 + b1), 0.0)
    h2 = jnp.maximum(bn(h1 @ w2a + act @ w2b + b2), 0.0)
    return h2 @ w4_row.T + b4


if __name__ == "__main__":
    key = jax.random.PRNGKey(0)
    k_obs, k_act, k_par = jax.random.split(key, 3)

    batch = 8
    state_size = 16
    action_size = 4

    obs = jax.random.normal(k_obs, (batch, state_size), jnp.float32)
    act = jax.random.normal(k_act, (batch, action_size), jnp.float32)
    w1, b1, w2a, w2b, b2, w4_row, b4 = init_params(k_par, state_size, action_size)

    out = critic_forward(obs, act, w1, w2a, w2b, w4_row, b4)
    out = jax.block_until_ready(out)

    ref = reference_forward(obs, act, w1, b1, w2a, w2b, b2, w4_row, b4)
    assert out.shape == (batch, 1)
    assert jnp.allclose(out, ref, atol=1e-4, rtol=1e-4), (out, ref)

    print("KERNEL_OK")
</pallas_src>

<mosaic_0001>
module attributes {stable_mosaic.version = 11 : i64} {
  func.func @critic_kernel(%arg0: memref<8x16xf32, #tpu.memory_space<vmem>>, %arg1: memref<8x4xf32, #tpu.memory_space<vmem>>, %arg2: memref<16x256xf32, #tpu.memory_space<vmem>>, %arg3: memref<256x128xf32, #tpu.memory_space<vmem>>, %arg4: memref<4x128xf32, #tpu.memory_space<vmem>>, %arg5: memref<1x128xf32, #tpu.memory_space<vmem>>, %arg6: memref<1xf32, #tpu.memory_space<smem>>, %arg7: memref<1x8xf32, #tpu.memory_space<vmem>>) attributes {dimension_semantics = [], scalar_prefetch = 0 : i64, scratch_operands = 0 : i64, tpu.core_type = #tpu.core_type<tc>} {
    %c0 = arith.constant 0 : index
    %c0_0 = arith.constant 0 : index
    %0 = vector.load %arg0[%c0, %c0_0] : memref<8x16xf32, #tpu.memory_space<vmem>>, vector<8x16xf32>
    %c0_1 = arith.constant 0 : index
    %c0_2 = arith.constant 0 : index
    %1 = vector.load %arg1[%c0_1, %c0_2] : memref<8x4xf32, #tpu.memory_space<vmem>>, vector<8x4xf32>
    %c0_3 = arith.constant 0 : index
    %c0_4 = arith.constant 0 : index
    %2 = vector.load %arg2[%c0_3, %c0_4] : memref<16x256xf32, #tpu.memory_space<vmem>>, vector<16x256xf32>
    %cst = arith.constant dense<0.000000e+00> : vector<8x256xf32>
    %3 = tpu.matmul %0, %2, %cst {dimension_numbers = #tpu.dot_dimension_numbers<[1], [0], [0], [1], [0, 0, 1, 1], [], []>} : vector<8x16xf32>, vector<16x256xf32>, vector<8x256xf32> -> vector<8x256xf32>
    %cst_5 = arith.constant dense<0.000000e+00> : vector<256xf32>
    %4 = vector.multi_reduction <add>, %3, %cst_5 [0] : vector<8x256xf32> to vector<256xf32>
    %5 = vector.shape_cast %4 : vector<256xf32> to vector<1x256xf32>
    %6 = arith.mulf %3, %3 : vector<8x256xf32>
    %cst_6 = arith.constant dense<0.000000e+00> : vector<256xf32>
    %7 = vector.multi_reduction <add>, %6, %cst_6 [0] : vector<8x256xf32> to vector<256xf32>
    %8 = vector.shape_cast %7 : vector<256xf32> to vector<1x256xf32>
    %cst_7 = arith.constant 1.250000e-01 : f32
    %9 = vector.broadcast %cst_7 : f32 to vector<1x256xf32>
    %10 = arith.mulf %5, %9 : vector<1x256xf32>
    %cst_8 = arith.constant 1.250000e-01 : f32
    %11 = vector.broadcast %cst_8 : f32 to vector<1x256xf32>
    %12 = arith.mulf %8, %11 : vector<1x256xf32>
    %13 = arith.mulf %10, %10 : vector<1x256xf32>
    %14 = arith.subf %12, %13 : vector<1x256xf32>
    %15 = vector.broadcast %10 : vector<1x256xf32> to vector<8x256xf32>
    %16 = arith.subf %3, %15 : vector<8x256xf32>
    %cst_9 = arith.constant 9.99999974E-6 : f32
    %17 = vector.broadcast %cst_9 : f32 to vector<1x256xf32>
    %18 = arith.addf %14, %17 : vector<1x256xf32>
    %19 = math.rsqrt %18 : vector<1x256xf32>
    %20 = vector.broadcast %19 : vector<1x256xf32> to vector<8x256xf32>
    %21 = arith.mulf %16, %20 : vector<8x256xf32>
    %cst_10 = arith.constant 0.000000e+00 : f32
    %22 = vector.broadcast %cst_10 : f32 to vector<8x256xf32>
    %23 = arith.maximumf %21, %22 : vector<8x256xf32>
    %c0_11 = arith.constant 0 : index
    %c0_12 = arith.constant 0 : index
    %24 = vector.load %arg3[%c0_11, %c0_12] : memref<256x128xf32, #tpu.memory_space<vmem>>, vector<256x128xf32>
    %cst_13 = arith.constant dense<0.000000e+00> : vector<8x128xf32>
    %25 = tpu.matmul %23, %24, %cst_13 {dimension_numbers = #tpu.dot_dimension_numbers<[1], [0], [0], [1], [0, 0, 1, 1], [], []>} : vector<8x256xf32>, vector<256x128xf32>, vector<8x128xf32> -> vector<8x128xf32>
    %c0_14 = arith.constant 0 : index
    %c0_15 = arith.constant 0 : index
    %26 = vector.load %arg4[%c0_14, %c0_15] : memref<4x128xf32, #tpu.memory_space<vmem>>, vector<4x128xf32>
    %27 = vector.extract_strided_slice %1 {offsets = [0, 0], sizes = [8, 1], strides = [1, 1]} : vector<8x4xf32> to vector<8x1xf32>
    %28 = vector.extract_strided_slice %26 {offsets = [0, 0], sizes = [1, 128], strides = [1, 1]} : vector<4x128xf32> to vector<1x128xf32>
    %29 = vector.broadcast %27 : vector<8x1xf32> to vector<8x128xf32>
    %30 = vector.broadcast %28 : vector<1x128xf32> to vector<8x128xf32>
    %31 = arith.mulf %29, %30 : vector<8x128xf32>
    %32 = arith.addf %25, %31 : vector<8x128xf32>
    %33 = vector.extract_strided_slice %1 {offsets = [0, 1], sizes = [8, 1], strides = [1, 1]} : vector<8x4xf32> to vector<8x1xf32>
    %34 = vector.extract_strided_slice %26 {offsets = [1, 0], sizes = [1, 128], strides = [1, 1]} : vector<4x128xf32> to vector<1x128xf32>
    %35 = vector.broadcast %33 : vector<8x1xf32> to vector<8x128xf32>
    %36 = vector.broadcast %34 : vector<1x128xf32> to vector<8x128xf32>
    %37 = arith.mulf %35, %36 : vector<8x128xf32>
    %38 = arith.addf %32, %37 : vector<8x128xf32>
    %39 = vector.extract_strided_slice %1 {offsets = [0, 2], sizes = [8, 1], strides = [1, 1]} : vector<8x4xf32> to vector<8x1xf32>
    %40 = vector.extract_strided_slice %26 {offsets = [2, 0], sizes = [1, 128], strides = [1, 1]} : vector<4x128xf32> to vector<1x128xf32>
    %41 = vector.broadcast %39 : vector<8x1xf32> to vector<8x128xf32>
    %42 = vector.broadcast %40 : vector<1x128xf32> to vector<8x128xf32>
    %43 = arith.mulf %41, %42 : vector<8x128xf32>
    %44 = arith.addf %38, %43 : vector<8x128xf32>
    %45 = vector.extract_strided_slice %1 {offsets = [0, 3], sizes = [8, 1], strides = [1, 1]} : vector<8x4xf32> to vector<8x1xf32>
    %46 = vector.extract_strided_slice %26 {offsets = [3, 0], sizes = [1, 128], strides = [1, 1]} : vector<4x128xf32> to vector<1x128xf32>
    %47 = vector.broadcast %45 : vector<8x1xf32> to vector<8x128xf32>
    %48 = vector.broadcast %46 : vector<1x128xf32> to vector<8x128xf32>
    %49 = arith.mulf %47, %48 : vector<8x128xf32>
    %50 = arith.addf %44, %49 : vector<8x128xf32>
    %cst_16 = arith.constant dense<0.000000e+00> : vector<128xf32>
    %51 = vector.multi_reduction <add>, %50, %cst_16 [0] : vector<8x128xf32> to vector<128xf32>
    %52 = vector.shape_cast %51 : vector<128xf32> to vector<1x128xf32>
    %53 = arith.mulf %50, %50 : vector<8x128xf32>
    %cst_17 = arith.constant dense<0.000000e+00> : vector<128xf32>
    %54 = vector.multi_reduction <add>, %53, %cst_17 [0] : vector<8x128xf32> to vector<128xf32>
    %55 = vector.shape_cast %54 : vector<128xf32> to vector<1x128xf32>
    %cst_18 = arith.constant 1.250000e-01 : f32
    %56 = vector.broadcast %cst_18 : f32 to vector<1x128xf32>
    %57 = arith.mulf %52, %56 : vector<1x128xf32>
    %cst_19 = arith.constant 1.250000e-01 : f32
    %58 = vector.broadcast %cst_19 : f32 to vector<1x128xf32>
    %59 = arith.mulf %55, %58 : vector<1x128xf32>
    %60 = arith.mulf %57, %57 : vector<1x128xf32>
    %61 = arith.subf %59, %60 : vector<1x128xf32>
    %62 = vector.broadcast %57 : vector<1x128xf32> to vector<8x128xf32>
    %63 = arith.subf %50, %62 : vector<8x128xf32>
    %cst_20 = arith.constant 9.99999974E-6 : f32
    %64 = vector.broadcast %cst_20 : f32 to vector<1x128xf32>
    %65 = arith.addf %61, %64 : vector<1x128xf32>
    %66 = math.rsqrt %65 : vector<1x128xf32>
    %67 = vector.broadcast %66 : vector<1x128xf32> to vector<8x128xf32>
    %68 = arith.mulf %63, %67 : vector<8x128xf32>
    %cst_21 = arith.constant 0.000000e+00 : f32
    %69 = vector.broadcast %cst_21 : f32 to vector<8x128xf32>
    %70 = arith.maximumf %68, %69 : vector<8x128xf32>
    %c0_22 = arith.constant 0 : index
    %c0_23 = arith.constant 0 : index
    %71 = vector.load %arg5[%c0_22, %c0_23] : memref<1x128xf32, #tpu.memory_space<vmem>>, vector<1x128xf32>
    %72 = vector.broadcast %71 : vector<1x128xf32> to vector<8x128xf32>
    %73 = arith.mulf %70, %72 : vector<8x128xf32>
    %cst_24 = arith.constant dense<0.000000e+00> : vector<8xf32>
    %74 = vector.multi_reduction <add>, %73, %cst_24 [1] : vector<8x128xf32> to vector<8xf32>
    %75 = vector.shape_cast %74 : vector<8xf32> to vector<1x8xf32>
    %c0_25 = arith.constant 0 : index
    %76 = memref.load %arg6[%c0_25] : memref<1xf32, #tpu.memory_space<smem>>
    %77 = vector.broadcast %76 : f32 to vector<1x8xf32>
    %78 = arith.addf %75, %77 : vector<1x8xf32>
    %c0_26 = arith.constant 0 : index
    %c0_27 = arith.constant 0 : index
    %79 = vector.load %arg7[%c0_26, %c0_27] : memref<1x8xf32, #tpu.memory_space<vmem>>, vector<1x8xf32>
    tpu.vector_store %arg7[%c0_26, %c0_27], %78 {strides = array<i32>} : memref<1x8xf32, #tpu.memory_space<vmem>>, vector<1x8xf32>,
    return
  }
}

</mosaic_0001>

<llo_original>
// kernel: critic_forward.1
$region0: #{critic_forward.1}
  #allocation0 [shape = 'u32[]', space=smem, size = 0x4, offset = 0x4, fixed_abs, tag = 'smem constant byte address 0x4 - core index']
  #allocation1 [shape = 'u32[72,128]{1,0:T(1,128)}', space=vmem, size = 0x9000, scoped, tag = 'internal scratch']
  #allocation2 [shape = 'f32[1]{0:T(128)S(6)}', space=smem, size = 0x200, scoped, tag = 'scoped memory for critic_forward.1']
  %s0 = inlined_call_operand.vmem [shape: f32[8,16], index: 0, kind: input, shape index: {}]
  %s1 = inlined_call_operand.vmem [shape: f32[8,4], index: 1, kind: input, shape index: {}]
  %s2 = inlined_call_operand.hbm [shape: f32[16,256], index: 2, kind: input, shape index: {}]
  %s3 = inlined_call_operand.hbm [shape: f32[256,128], index: 3, kind: input, shape index: {}]
  %s4 = inlined_call_operand.vmem [shape: f32[4,128], index: 4, kind: input, shape index: {}]
  %s5 = inlined_call_operand.vmem [shape: f32[1,128], index: 5, kind: input, shape index: {}]
  %s6 = inlined_call_operand.<no memory space> [shape: f32[1], index: 6, kind: input, shape index: {}]
  %s7 = inlined_call_operand.hbm [shape: f32[1,8], index: 7, kind: output, shape index: {}]
  %s8 = sld [smem:[#allocation0]]
  $region46: #{critic_forward.1} parent=0
    _
  %s10 = ssub.s32 1, %s8
  %s11 = scalar_select 0, %s10, %s8
  %12 = sst [smem:[#allocation2]] %s6
  $region1: #{critic_forward.1} parent=0
    #allocation3 [shape = 'u8[16384]{0}', space=vmem, size = 0x4000, scoped, tag = 'input window, operand 2, single buffered']
    #allocation4 [shape = 's32[1]{0}', space=sflag, size = 0x4, scoped, tag = 'scoped memory for critic_forward.1']
    #allocation5 [shape = 's32[1]{0}', space=sflag, size = 0x4, scoped, tag = 'scoped memory for critic_forward.1']
    #allocation6 [shape = 'u8[131072]{0}', space=vmem, size = 0x20000, scoped, tag = 'input window, operand 3, single buffered']
    #allocation7 [shape = 's32[1]{0}', space=sflag, size = 0x4, scoped, tag = 'scoped memory for critic_forward.1']
    #allocation8 [shape = 'u8[512]{0}', space=vmem, size = 0x400, scoped, tag = 'output window, operand 0, single buffered']
    %13 = vsyncpa [#allocation4], 0
    %14 = vsyncpa [#allocation7], 0
    %15 = vsyncpa [#allocation5], 0
    // Predicated region
    $region2: #{critic_forward.1} parent=1 // pred_check
      _
    $region3: #{critic_forward.1} parent=1 // pred_check_branch
      %17 = sbr.rel (0) target = $region5
    $region4: #{critic_forward.1} parent=1 // pred_region
      _
    $region5: #{critic_forward.1} parent=1 // pred_fallthru
      _
    // Predicated region
    $region6: #{critic_forward.1} parent=1 // pred_check
      _
    $region7: #{critic_forward.1} parent=1 // pred_check_branch
      %19 = sbr.rel (0) target = $region9
    $region8: #{critic_forward.1} parent=1 // pred_region
      _
    $region9: #{critic_forward.1} parent=1 // pred_fallthru
      _
    // Predicated region
    $region10: #{critic_forward.1} parent=1 // pred_check
      _
    $region11: #{critic_forward.1} parent=1 // pred_check_branch
      %21 = sbr.rel (0) target = $region13
    $region12: #{critic_forward.1} parent=1 // pred_region
      %23 = vsyncadd [#allocation4], 0
      %s24 = sshll.u32 %s2, 4
      %s25 = int_to_ptr.hbm [resolvable:$true] %s24
      %s26 = sshll.u32 [#allocation3], 4
      %s27 = int_to_ptr.vmem [resolvable:$true] %s26
      %32 = dma.hbm_to_vmem [thread:$0]  %s25, 512, %s27, [#allocation4], 256, 256, 16
    $region13: #{critic_forward.1} parent=1 // pred_fallthru
      _
    // Predicated region
    $region14: #{critic_forward.1} parent=1 // pred_check
      _
    $region15: #{critic_forward.1} parent=1 // pred_check_branch
      %34 = sbr.rel (0) target = $region17
    $region16: #{critic_forward.1} parent=1 // pred_region
      %36 = vsyncadd [#allocation7], 0
      %s37 = sshll.u32 %s3, 4
      %s38 = int_to_ptr.hbm [resolvable:$true] %s37
      %s39 = sshll.u32 [#allocation6], 4
      %s40 = int_to_ptr.vmem [resolvable:$true] %s39
      %45 = dma.hbm_to_vmem [thread:$0]  %s38, 4096, %s40, [#allocation7], 128, 128, 8
    $region17: #{critic_forward.1} parent=1 // pred_fallthru
      _
    // Predicated region
    $region18: #{critic_forward.1} parent=1 // pred_check
      _
    $region19: #{critic_forward.1} parent=1 // pred_check_branch
      %47 = sbr.rel (0) target = $region21
    $region20: #{critic_forward.1} parent=1 // pred_region
      _
    $region21: #{critic_forward.1} parent=1 // pred_fallthru
      _
    // Predicated region
    $region22: #{critic_forward.1} parent=1 // pred_check
      _
    $region23: #{critic_forward.1} parent=1 // pred_check_branch
      %49 = sbr.rel (0) target = $region25
    $region24: #{critic_forward.1} parent=1 // pred_region
      _
    $region25: #{critic_forward.1} parent=1 // pred_fallthru
      _
    // Predicated region
    $region26: #{critic_forward.1} parent=1 // pred_check
      _
    $region27: #{critic_forward.1} parent=1 // pred_check_branch
      %51 = sbr.rel (0) target = $region29
    $region28: #{critic_forward.1} parent=1 // pred_region
      _
    $region29: #{critic_forward.1} parent=1 // pred_fallthru
      _
    // Predicated region
    $region30: #{critic_forward.1} parent=1 // pred_check
      _
    $region31: #{critic_forward.1} parent=1 // pred_check_branch
      %53 = sbr.rel (0) target = $region33
    $region32: #{critic_forward.1} parent=1 // pred_region
      %55 = dma.done [#allocation4], 512
    $region33: #{critic_forward.1} parent=1 // pred_fallthru
      _
    // Predicated region
    $region34: #{critic_forward.1} parent=1 // pred_check
      _
    $region35: #{critic_forward.1} parent=1 // pred_check_branch
      %57 = sbr.rel (0) target = $region37
    $region36: #{critic_forward.1} parent=1 // pred_region
      %59 = dma.done [#allocation7], 4096
    $region37: #{critic_forward.1} parent=1 // pred_fallthru
      _
    %v60 = vld [vmem:[%s0] sm:$0xff]
    %v61 = vld [vmem:[%s1] sm:$0xff]
    %v62 = vld [vmem:[#allocation3] sm:$0xff]
    %v63 = vld [vmem:[#allocation3 + $0x8] sm:$0xff]
    %v64 = vld [vmem:[#allocation3 + $0x10] sm:$0xff]
    %v65 = vld [vmem:[#allocation3 + $0x18] sm:$0xff]
    %vm66 = vcmask 130048
    %v68 = vsel %vm66, %v60, 0
    %70 = vmatpush.msra.mxu0 0.0
    %71 = vmatpush.msra.mxu0 0.0
    %72 = vmatpush.msra.mxu0 0.0
    %73 = vmatpush.msra.mxu0 0.0
    %74 = vmatpush.msra.mxu0 0.0
    %75 = vmatpush.msra.mxu0 0.0
    %76 = vmatpush.msra.mxu0 0.0
    %77 = vmatpush.msra.mxu0 0.0
    %78 = vmatpush.msra.mxu0 0.0
    %79 = vmatpush.msra.mxu0 0.0
    %80 = vmatpush.msra.mxu0 0.0
    %81 = vmatpush.msra.mxu0 0.0
    %82 = vmatpush.msra.mxu0 0.0
    %83 = vmatpush.msra.mxu0 0.0
    %84 = vmatpush.msra.mxu0 %v64
    %85 = vmatpush.msra.mxu0 %v62
    %86 = vmatmul.f32.gmra.mxu0 %v68
    %v87 = vpop.f32.mrf.mxu0
    %v88 = vadd.f32 0.0, %v87
    %89 = vdwg.mxu0
    %90 = vmatpush.msra.mxu0 0.0
    %91 = vmatpush.msra.mxu0 0.0
    %92 = vmatpush.msra.mxu0 0.0
    %93 = vmatpush.msra.mxu0 0.0
    %94 = vmatpush.msra.mxu0 0.0
    %95 = vmatpush.msra.mxu0 0.0
    %96 = vmatpush.msra.mxu0 0.0
    %97 = vmatpush.msra.mxu0 0.0
    %98 = vmatpush.msra.mxu0 0.0
    %99 = vmatpush.msra.mxu0 0.0
    %100 = vmatpush.msra.mxu0 0.0
    %101 = vmatpush.msra.mxu0 0.0
    %102 = vmatpush.msra.mxu0 0.0
    %103 = vmatpush.msra.mxu0 0.0
    %104 = vmatpush.msra.mxu0 %v65
    %105 = vmatpush.msra.mxu0 %v63
    %106 = vmatmul.f32.gmra.mxu0 %v68
    %v107 = vpop.f32.mrf.mxu0
    %v108 = vadd.f32 0.0, %v107
    %109 = vdwg.mxu0
    %v110 = vrot.slane %v88, 4
    %v111 = vadd.f32 %v88, %v110
    %v112 = vrot.slane %v111, 2
    %v113 = vadd.f32 %v111, %v112
    %v114 = vrot.slane %v113, 1
    %v115 = vadd.f32 %v113, %v114
    %v116 = vrot.slane %v108, 4
    %v117 = vadd.f32 %v108, %v116
    %v118 = vrot.slane %v117, 2
    %v119 = vadd.f32 %v117, %v118
    %v120 = vrot.slane %v119, 1
    %v121 = vadd.f32 %v119, %v120
    %v122 = vmul.f32 %v88, %v88
    %v123 = vmul.f32 %v108, %v108
    %v124 = vrot.slane %v122, 4
    %v125 = vadd.f32 %v122, %v124
    %v126 = vrot.slane %v125, 2
    %v127 = vadd.f32 %v125, %v126
    %v128 = vrot.slane %v127, 1
    %v129 = vadd.f32 %v127, %v128
    %v130 = vrot.slane %v123, 4
    %v131 = vadd.f32 %v123, %v130
    %v132 = vrot.slane %v131, 2
    %v133 = vadd.f32 %v131, %v132
    %v134 = vrot.slane %v133, 1
    %v135 = vadd.f32 %v133, %v134
    %v136 = vmul.f32 %v115, 0.125
    %v137 = vmul.f32 %v121, 0.125
    %v138 = vmul.f32 %v129, 0.125
    %v139 = vmul.f32 %v135, 0.125
    %v140 = vmul.f32 %v136, %v136
    %v141 = vmul.f32 %v137, %v137
    %v142 = vsub.f32 %v138, %v140
    %v143 = vsub.f32 %v139, %v141
    %v144 = vsub.f32 %v88, %v136
    %v145 = vsub.f32 %v108, %v137
    %v146 = vadd.f32 %v142, 1e-05
    %v147 = vadd.f32 %v143, 1e-05
    %v148 = vrsqrt.pop %v146
    %v149 = vmul.f32 %v148, %v146
    %v150 = vmul.f32 %v149, %v148
    %v151 = vmul.f32 0.5, %v150
    %v152 = vsub.f32 1.5, %v151
    %v153 = vmul.f32 %v148, %v152
    %vm154 = vweird.f32 %v146
    %vm155 = vweird.f32 %v148
    %vm156 = vmor %vm154, %vm155
    %v157 = vsel %vm156, %v148, %v153
    %v158 = vrsqrt.pop %v147
    %v159 = vmul.f32 %v158, %v147
    %v160 = vmul.f32 %v159, %v158
    %v161 = vmul.f32 0.5, %v160
    %v162 = vsub.f32 1.5, %v161
    %v163 = vmul.f32 %v158, %v162
    %vm164 = vweird.f32 %v147
    %vm165 = vweird.f32 %v158
    %vm166 = vmor %vm164, %vm165
    %v167 = vsel %vm166, %v158, %v163
    %v168 = vmul.f32 %v144, %v157
    %v169 = vmul.f32 %v145, %v167
    %v170 = vmax.f32 %v168, 0.0
    %v171 = vmax.f32 %v169, 0.0
    %v172 = vld [vmem:[#allocation6] sm:$0xff]
    %v173 = vld [vmem:[#allocation6 + $0x8] sm:$0xff]
    %v174 = vld [vmem:[#allocation6 + $0x10] sm:$0xff]
    %v175 = vld [vmem:[#allocation6 + $0x18] sm:$0xff]
    %v176 = vld [vmem:[#allocation6 + $0x20] sm:$0xff]
    %v177 = vld [vmem:[#allocation6 + $0x28] sm:$0xff]
    %v178 = vld [vmem:[#allocation6 + $0x30] sm:$0xff]
    %v179 = vld [vmem:[#allocation6 + $0x38] sm:$0xff]
    %v180 = vld [vmem:[#allocation6 + $0x40] sm:$0xff]
    %v181 = vld [vmem:[#allocation6 + $0x48] sm:$0xff]
    %v182 = vld [vmem:[#allocation6 + $0x50] sm:$0xff]
    %v183 = vld [vmem:[#allocation6 + $0x58] sm:$0xff]
    %v184 = vld [vmem:[#allocation6 + $0x60] sm:$0xff]
    %v185 = vld [vmem:[#allocation6 + $0x68] sm:$0xff]
    %v186 = vld [vmem:[#allocation6 + $0x70] sm:$0xff]
    %v187 = vld [vmem:[#allocation6 + $0x78] sm:$0xff]
    %v188 = vld [vmem:[#allocation6 + $0x80] sm:$0xff]
    %v189 = vld [vmem:[#allocation6 + $0x88] sm:$0xff]
    %v190 = vld [vmem:[#allocation6 + $0x90] sm:$0xff]
    %v191 = vld [vmem:[#allocation6 + $0x98] sm:$0xff]
    %v192 = vld [vmem:[#allocation6 + $0xa0] sm:$0xff]
    %v193 = vld [vmem:[#allocation6 + $0xa8] sm:$0xff]
    %v194 = vld [vmem:[#allocation6 + $0xb0] sm:$0xff]
    %v195 = vld [vmem:[#allocation6 + $0xb8] sm:$0xff]
    %v196 = vld [vmem:[#allocation6 + $0xc0] sm:$0xff]
    %v197 = vld [vmem:[#allocation6 + $0xc8] sm:$0xff]
    %v198 = vld [vmem:[#allocation6 + $0xd0] sm:$0xff]
    %v199 = vld [vmem:[#allocation6 + $0xd8] sm:$0xff]
    %v200 = vld [vmem:[#allocation6 + $0xe0] sm:$0xff]
    %v201 = vld [vmem:[#allocation6 + $0xe8] sm:$0xff]
    %v202 = vld [vmem:[#allocation6 + $0xf0] sm:$0xff]
    %v203 = vld [vmem:[#allocation6 + $0xf8] sm:$0xff]
    %v204 = vld [vmem:[%s4] sm:$0xf]
    %206 = vset.pattern.permute.xlu0 0
    %207 = vperm.xlu0 %206, %v61
    %v208 = vpop.permute.xlu0 %207
    %v210 = vperm.slane %v204, 0
    %v211 = vmul.f32 %v208, %v210
    %212 = vmatpush.msra.mxu0 %v187
    %213 = vmatpush.msra.mxu0 %v186
    %214 = vmatpush.msra.mxu0 %v185
    %215 = vmatpush.msra.mxu0 %v184
    %216 = vmatpush.msra.mxu0 %v183
    %217 = vmatpush.msra.mxu0 %v182
    %218 = vmatpush.msra.mxu0 %v181
    %219 = vmatpush.msra.mxu0 %v180
    %220 = vmatpush.msra.mxu0 %v179
    %221 = vmatpush.msra.mxu0 %v178
    %222 = vmatpush.msra.mxu0 %v177
    %223 = vmatpush.msra.mxu0 %v176
    %224 = vmatpush.msra.mxu0 %v175
    %225 = vmatpush.msra.mxu0 %v174
    %226 = vmatpush.msra.mxu0 %v173
    %227 = vmatpush.msra.mxu0 %v172
    %228 = vmatmul.f32.gmra.mxu0 %v170
    %v229 = vpop.f32.mrf.mxu0
    %v230 = vadd.f32 %v211, %v229
    %231 = vdwg.mxu0
    %232 = vmatpush.msra.mxu0 %v203
    %233 = vmatpush.msra.mxu0 %v202
    %234 = vmatpush.msra.mxu0 %v201
    %235 = vmatpush.msra.mxu0 %v200
    %236 = vmatpush.msra.mxu0 %v199
    %237 = vmatpush.msra.mxu0 %v198
    %238 = vmatpush.msra.mxu0 %v197
    %239 = vmatpush.msra.mxu0 %v196
    %240 = vmatpush.msra.mxu0 %v195
    %241 = vmatpush.msra.mxu0 %v194
    %242 = vmatpush.msra.mxu0 %v193
    %243 = vmatpush.msra.mxu0 %v192
    %244 = vmatpush.msra.mxu0 %v191
    %245 = vmatpush.msra.mxu0 %v190
    %246 = vmatpush.msra.mxu0 %v189
    %247 = vmatpush.msra.mxu0 %v188
    %248 = vmatmul.f32.gmra.mxu0 %v171
    %v249 = vpop.f32.mrf.mxu0
    %v250 = vadd.f32 %v230, %v249
    %251 = vdwg.mxu0
    %252 = vset.pattern.permute.xlu0 1
    %253 = vperm.xlu0 %252, %v61
    %v254 = vpop.permute.xlu0 %253
    %v256 = vperm.slane %v204, 1
    %v257 = vmul.f32 %v254, %v256
    %v258 = vadd.f32 %v250, %v257
    %259 = vset.pattern.permute.xlu0 2
    %260 = vperm.xlu0 %259, %v61
    %v261 = vpop.permute.xlu0 %260
    %v263 = vperm.slane %v204, 2
    %v264 = vmul.f32 %v261, %v263
    %v265 = vadd.f32 %v258, %v264
    %266 = vset.pattern.permute.xlu0 3
    %267 = vperm.xlu0 %266, %v61
    %v268 = vpop.permute.xlu0 %267
    %v270 = vperm.slane %v204, 3
    %v271 = vmul.f32 %v268, %v270
    %v272 = vadd.f32 %v265, %v271
    %v273 = vrot.slane %v272, 4
    %v274 = vadd.f32 %v272, %v273
    %v275 = vrot.slane %v274, 2
    %v276 = vadd.f32 %v274, %v275
    %v277 = vrot.slane %v276, 1
    %v278 = vadd.f32 %v276, %v277
    %v279 = vmul.f32 %v272, %v272
    %v280 = vrot.slane %v279, 4
    %v281 = vadd.f32 %v279, %v280
    %v282 = vrot.slane %v281, 2
    %v283 = vadd.f32 %v281, %v282
    %v284 = vrot.slane %v283, 1
    %v285 = vadd.f32 %v283, %v284
    %v286 = vmul.f32 %v278, 0.125
    %v287 = vmul.f32 %v285, 0.125
    %v288 = vmul.f32 %v286, %v286
    %v289 = vsub.f32 %v287, %v288
    %v290 = vsub.f32 %v272, %v286
    %v291 = vadd.f32 %v289, 1e-05
    %v292 = vrsqrt.pop %v291
    %v293 = vmul.f32 %v292, %v291
    %v294 = vmul.f32 %v293, %v292
    %v295 = vmul.f32 0.5, %v294
    %v296 = vsub.f32 1.5, %v295
    %v297 = vmul.f32 %v292, %v296
    %vm298 = vweird.f32 %v291
    %vm299 = vweird.f32 %v292
    %vm300 = vmor %vm298, %vm299
    %v301 = vsel %vm300, %v292, %v297
    %v302 = vmul.f32 %v290, %v301
    %v303 = vmax.f32 %v302, 0.0
    %v304 = vld [vmem:[%s5] sm:$0x1]
    %v306 = vperm.slane %v304, 0
    %v308 = vmul.f32 %v303, %v306
    %309 = vadd.xlane.f32.xlu0 %v308
    %v310 = vpop.xlane.xlu0 %309
    %s311 = sld [smem:[#allocation2]]
    %v312 = vstv %s311
    %v313 = vadd.f32 %v310, %v312
    %v315 = vlaneseq
    %v316 = vand.u32 %v315, 127
    %v317 = vperm.slane %v313, %v316
    %vm319 = vcmask 57344
    %320 = vst.msk [vmem:[#allocation8] sm:$0x1] %vm319, %v317
    // Predicated region
    $region38: #{critic_forward.1} parent=1 // pred_check
      _
    $region39: #{critic_forward.1} parent=1 // pred_check_branch
      %322 = sbr.rel (0) target = $region41
    $region40: #{critic_forward.1} parent=1 // pred_region
      %324 = vsyncadd [#allocation5], 0
      %s326 = sshll.u32 [#allocation8], 4
      %s327 = int_to_ptr.vmem [resolvable:$true] %s326
      %s328 = sshll.u32 %s7, 4
      %s329 = int_to_ptr.hbm [resolvable:$true] %s328
      %331 = dma.vmem_to_hbm [thread:$0]  %s327, 16, %s329, [#allocation5]
    $region41: #{critic_forward.1} parent=1 // pred_fallthru
      _
    // Predicated region
    $region42: #{critic_forward.1} parent=1 // pred_check
      _
    $region43: #{critic_forward.1} parent=1 // pred_check_branch
      %333 = sbr.rel (0) target = $region45
    $region44: #{critic_forward.1} parent=1 // pred_region
      %335 = dma.done [#allocation5], 16
    $region45: #{critic_forward.1} parent=1 // pred_fallthru
      _
    %336 = vsyncpa [#allocation4], 1
    %337 = vsyncpa [#allocation7], 1
    %338 = vsyncpa [#allocation5], 1

</llo_original>
